<compile_context>
chip_gen: v6e
topology: v6e:2x2x1
jax: 0.10.0
libtpu: 0.0.40
codegen_flags: <defaults>
</compile_context>

<pallas_src>
import numpy as np
import jax
import jax.numpy as jnp
from jax.experimental import pallas as pl
from jax.experimental.pallas import tpu as pltpu


def _adaptive_pool_matrix(in_size: int, out_size: int) -> np.ndarray:
    """Averaging matrix P (out_size, in_size) reproducing torch adaptive_avg_pool bins."""
    p = np.zeros((out_size, in_size), dtype=np.float32)
    for i in range(out_size):
        start = (i * in_size) // out_size
        end = -((-(i + 1) * in_size) // out_size)  # ceil((i+1)*in/out)
        p[i, start:end] = 1.0 / float(end - start)
    return p


def _pool_kernel(p_ref, x_ref, o_ref):
    # p_ref: (H*W, OH*OW), x_ref: (B, H*W), o_ref: (B, OH*OW)
    o_ref[...] = jnp.dot(
        x_ref[...], p_ref[...], preferred_element_type=jnp.float32
    ).astype(o_ref.dtype)


def _choose_block(nc: int, hw: int, itemsize: int) -> int:
    """Pick B (planes per grid step): ~1 MiB of input per block, multiple of 8."""
    target_bytes = 1 << 20
    b = max(8, (target_bytes // max(hw * itemsize, 1)) // 8 * 8)
    b = min(b, 2048)
    b = min(b, ((nc + 7) // 8) * 8)          # no bigger than the (padded) problem
    if nc > 8:
        # Keep at least 2 grid steps so both v7x TensorCores get a share.
        half = -(-nc // 2)
        b = min(b, ((half + 7) // 8) * 8)
    return max(b, 8)


def adaptive_avg_pool_2d(x: jax.Array, output_sizes) -> jax.Array:
    """x: (N, C, H, W).  Returns (N, C, OH, OW) with torch adaptive_avg_pool2d semantics."""
    if isinstance(output_sizes, int):
        output_sizes = (output_sizes, output_sizes)
    N, C, H, W = x.shape
    OH = H if output_sizes[0] is None else int(output_sizes[0])
    OW = W if output_sizes[1] is None else int(output_sizes[1])
    NC, HW, OHW = N * C, H * W, OH * OW

    # Combined pooling matrix: P[h*W + w, oh*OW + ow] = Ph[oh, h] * Pw[ow, w]
    ph = _adaptive_pool_matrix(H, OH)                         # (OH, H)
    pw = _adaptive_pool_matrix(W, OW)                         # (OW, W)
    p4 = ph[:, :, None, None] * pw[None, None, :, :]          # (OH, H, OW, W)
    p_np = p4.transpose(1, 3, 0, 2).reshape(HW, OHW)          # (H*W, OH*OW)
    p = jnp.asarray(p_np).astype(x.dtype)

    B = _choose_block(NC, HW, jnp.dtype(x.dtype).itemsize)
    nc_pad = pl.cdiv(NC, B) * B

    x_flat = x.reshape(NC, HW)                                # free reshape, lane-dense
    if nc_pad != NC:
        x_flat = jnp.pad(x_flat, ((0, nc_pad - NC), (0, 0)))  # zero planes, sliced off below

    out = pl.pallas_call(
        _pool_kernel,
        out_shape=jax.ShapeDtypeStruct((nc_pad, OHW), x.dtype),
        grid_spec=pltpu.PrefetchScalarGridSpec(
            num_scalar_prefetch=0,
            grid=(nc_pad // B,),
            in_specs=[
                pl.BlockSpec((HW, OHW), lambda i: (0, 0)),    # pooling matrix (resident)
                pl.BlockSpec((B, HW), lambda i: (i, 0)),      # B planes per step
            ],
            out_specs=pl.BlockSpec((B, OHW), lambda i: (i, 0)),
        ),
        compiler_params=pltpu.CompilerParams(
            dimension_semantics=("parallel",)),
    )(p, x_flat)

    return out[:NC].reshape(N, C, OH, OW)


class AdaptivePool2d:
    """JAX/Pallas port of laia.nn.AdaptivePool2d (plain-Tensor path)."""

    def __init__(self, output_sizes, func=adaptive_avg_pool_2d):
        self._output_sizes = output_sizes
        self._func = func
        self._fixed_size = isinstance(output_sizes, int) or (
            output_sizes[0] is not None and output_sizes[1] is not None
        )

    @property
    def output_sizes(self):
        return self._output_sizes

    def __call__(self, x: jax.Array) -> jax.Array:
        return self._func(x, self.output_sizes)


def _reference(x: np.ndarray, oh: int, ow: int) -> np.ndarray:
    """Pure-numpy adaptive avg pool (torch semantics) for verification."""
    N, C, H, W = x.shape
    y = np.zeros((N, C, oh, ow), dtype=np.float32)
    for i in range(oh):
        hs, he = (i * H) // oh, -((-(i + 1) * H) // oh)
        for j in range(ow):
            ws, we = (j * W) // ow, -((-(j + 1) * W) // ow)
            y[:, :, i, j] = x[:, :, hs:he, ws:we].mean(axis=(2, 3))
    return y


if __name__ == "__main__":
    key = jax.random.PRNGKey(0)
    N, C, H, W = 2, 4, 16, 16
    OH, OW = 4, 8  # fixed output sizes (non-trivial, non-square)

    x = jax.random.normal(key, (N, C, H, W), dtype=jnp.float32)

    pool = AdaptivePool2d((OH, OW))
    y = pool(x)
    y = jax.block_until_ready(y)

    y_ref = _reference(np.asarray(x), OH, OW)
    assert y.shape == (N, C, OH, OW)
    np.testing.assert_allclose(np.asarray(y), y_ref, rtol=1e-5, atol=1e-5)

    print("KERNEL_OK")
</pallas_src>

<mosaic_0001>
module attributes {stable_mosaic.version = 11 : i64} {
  func.func @_pool_kernel(%arg0: i32, %arg1: memref<256x32xf32, #tpu.memory_space<vmem>>, %arg2: memref<8x256xf32, #tpu.memory_space<vmem>>, %arg3: memref<8x32xf32, #tpu.memory_space<vmem>>) attributes {dimension_semantics = [#tpu.dimension_semantics<parallel>], iteration_bounds = array<i64: 1>, scalar_prefetch = 0 : i64, scratch_operands = 0 : i64, tpu.core_type = #tpu.core_type<tc>, window_params = [{pipeline_mode = #tpu.pipeline_mode<synchronous>, transform_indices = @transform_0, window_bounds = array<i64: 256, 32>}, {transform_indices = @transform_1, window_bounds = array<i64: 8, 256>}, {transform_indices = @transform_2, window_bounds = array<i64: 8, 32>}]} {
    %c0 = arith.constant 0 : index
    %c0_0 = arith.constant 0 : index
    %0 = vector.load %arg2[%c0, %c0_0] : memref<8x256xf32, #tpu.memory_space<vmem>>, vector<8x256xf32>
    %c0_1 = arith.constant 0 : index
    %c0_2 = arith.constant 0 : index
    %1 = vector.load %arg1[%c0_1, %c0_2] : memref<256x32xf32, #tpu.memory_space<vmem>>, vector<256x32xf32>
    %cst = arith.constant dense<0.000000e+00> : vector<8x32xf32>
    %2 = tpu.matmul %0, %1, %cst {dimension_numbers = #tpu.dot_dimension_numbers<[1], [0], [0], [1], [0, 0, 1, 1], [], []>} : vector<8x256xf32>, vector<256x32xf32>, vector<8x32xf32> -> vector<8x32xf32>
    %c0_3 = arith.constant 0 : index
    %c0_4 = arith.constant 0 : index
    %3 = vector.load %arg3[%c0_3, %c0_4] : memref<8x32xf32, #tpu.memory_space<vmem>>, vector<8x32xf32>
    tpu.vector_store %arg3[%c0_3, %c0_4], %2 {strides = array<i32>} : memref<8x32xf32, #tpu.memory_space<vmem>>, vector<8x32xf32>,
    return
  }
  func.func @transform_0(%arg0: i32) -> (i32, i32) {
    %c0_i32 = arith.constant 0 : i32
    %c0_i32_0 = arith.constant 0 : i32
    %c0_i32_1 = arith.constant 0 : i32
    return %c0_i32, %c0_i32_0 : i32, i32
  }
  func.func @transform_1(%arg0: i32) -> (i32, i32) {
    %c0_i32 = arith.constant 0 : i32
    %c0_i32_0 = arith.constant 0 : i32
    return %arg0, %c0_i32 : i32, i32
  }
  func.func @transform_2(%arg0: i32) -> (i32, i32) {
    %c0_i32 = arith.constant 0 : i32
    %c0_i32_0 = arith.constant 0 : i32
    return %arg0, %c0_i32 : i32, i32
  }
}

</mosaic_0001>

<llo_original>
// kernel: tpu_custom_call.1
$region0: #{tpu_custom_call.1}
  #allocation0 [shape = 'u32[]', space=smem, size = 0x4, offset = 0x4, fixed_abs, tag = 'smem constant byte address 0x4 - core index']
  #allocation1 [shape = 'u32[144,128]{1,0:T(1,128)}', space=vmem, size = 0x12000, scoped, tag = 'internal scratch']
  %s0 = inlined_call_operand.vmem [shape: f32[256,32], index: 0, kind: input, shape index: {}]
  %s1 = inlined_call_operand.vmem [shape: f32[8,256], index: 1, kind: input, shape index: {}]
  %s2 = inlined_call_operand.hbm [shape: f32[8,32], index: 2, kind: output, shape index: {}]
  %s3 = sld [smem:[#allocation0]]
  $region18: #{tpu_custom_call.1} parent=0
    _
  %s5 = ssub.s32 1, %s3
  %s6 = scalar_select 0, %s5, %s3
  $region1: #{tpu_custom_call.1} parent=0
    #allocation2 [shape = 'u8[4096]{0}', space=vmem, size = 0x1000, scoped, tag = 'output window, operand 0, single buffered']
    #allocation3 [shape = 's32[1]{0}', space=sflag, size = 0x4, scoped, tag = 'scoped memory for tpu_custom_call.1']
    %7 = vsyncpa [#allocation3], 0
    // Predicated region
    $region2: #{tpu_custom_call.1} parent=1 // pred_check
      _
    $region3: #{tpu_custom_call.1} parent=1 // pred_check_branch
      %9 = sbr.rel (0) target = $region5
    $region4: #{tpu_custom_call.1} parent=1 // pred_region
      _
    $region5: #{tpu_custom_call.1} parent=1 // pred_fallthru
      _
    // Predicated region
    $region6: #{tpu_custom_call.1} parent=1 // pred_check
      _
    $region7: #{tpu_custom_call.1} parent=1 // pred_check_branch
      %11 = sbr.rel (0) target = $region9
    $region8: #{tpu_custom_call.1} parent=1 // pred_region
      _
    $region9: #{tpu_custom_call.1} parent=1 // pred_fallthru
      _
    %v12 = vld [vmem:[%s1] sm:$0xff]
    %v13 = vld [vmem:[%s1 + $0x8] sm:$0xff]
    %v14 = vld [vmem:[%s0] sm:$0xff]
    %v15 = vld [vmem:[%s0 + $0x8] sm:$0xff]
    %v16 = vld [vmem:[%s0 + $0x10] sm:$0xff]
    %v17 = vld [vmem:[%s0 + $0x18] sm:$0xff]
    %v18 = vld [vmem:[%s0 + $0x20] sm:$0xff]
    %v19 = vld [vmem:[%s0 + $0x28] sm:$0xff]
    %v20 = vld [vmem:[%s0 + $0x30] sm:$0xff]
    %v21 = vld [vmem:[%s0 + $0x38] sm:$0xff]
    %v22 = vld [vmem:[%s0 + $0x40] sm:$0xff]
    %v23 = vld [vmem:[%s0 + $0x48] sm:$0xff]
    %v24 = vld [vmem:[%s0 + $0x50] sm:$0xff]
    %v25 = vld [vmem:[%s0 + $0x58] sm:$0xff]
    %v26 = vld [vmem:[%s0 + $0x60] sm:$0xff]
    %v27 = vld [vmem:[%s0 + $0x68] sm:$0xff]
    %v28 = vld [vmem:[%s0 + $0x70] sm:$0xff]
    %v29 = vld [vmem:[%s0 + $0x78] sm:$0xff]
    %v30 = vld [vmem:[%s0 + $0x80] sm:$0xff]
    %v31 = vld [vmem:[%s0 + $0x88] sm:$0xff]
    %v32 = vld [vmem:[%s0 + $0x90] sm:$0xff]
    %v33 = vld [vmem:[%s0 + $0x98] sm:$0xff]
    %v34 = vld [vmem:[%s0 + $0xa0] sm:$0xff]
    %v35 = vld [vmem:[%s0 + $0xa8] sm:$0xff]
    %v36 = vld [vmem:[%s0 + $0xb0] sm:$0xff]
    %v37 = vld [vmem:[%s0 + $0xb8] sm:$0xff]
    %v38 = vld [vmem:[%s0 + $0xc0] sm:$0xff]
    %v39 = vld [vmem:[%s0 + $0xc8] sm:$0xff]
    %v40 = vld [vmem:[%s0 + $0xd0] sm:$0xff]
    %v41 = vld [vmem:[%s0 + $0xd8] sm:$0xff]
    %v42 = vld [vmem:[%s0 + $0xe0] sm:$0xff]
    %v43 = vld [vmem:[%s0 + $0xe8] sm:$0xff]
    %v44 = vld [vmem:[%s0 + $0xf0] sm:$0xff]
    %v45 = vld [vmem:[%s0 + $0xf8] sm:$0xff]
    %46 = vmatprep.subr.mxu0 0.0
    %47 = vmatpush1.msra.mxu0 %v29
    %48 = vmatprep.subr.mxu0 0.0
    %49 = vmatpush1.msra.mxu0 %v28
    %50 = vmatprep.subr.mxu0 0.0
    %51 = vmatpush1.msra.mxu0 %v27
    %52 = vmatprep.subr.mxu0 0.0
    %53 = vmatpush1.msra.mxu0 %v26
    %54 = vmatprep.subr.mxu0 0.0
    %55 = vmatpush1.msra.mxu0 %v25
    %56 = vmatprep.subr.mxu0 0.0
    %57 = vmatpush1.msra.mxu0 %v24
    %58 = vmatprep.subr.mxu0 0.0
    %59 = vmatpush1.msra.mxu0 %v23
    %60 = vmatprep.subr.mxu0 0.0
    %61 = vmatpush1.msra.mxu0 %v22
    %62 = vmatprep.subr.mxu0 0.0
    %63 = vmatpush1.msra.mxu0 %v21
    %64 = vmatprep.subr.mxu0 0.0
    %65 = vmatpush1.msra.mxu0 %v20
    %66 = vmatprep.subr.mxu0 0.0
    %67 = vmatpush1.msra.mxu0 %v19
    %68 = vmatprep.subr.mxu0 0.0
    %69 = vmatpush1.msra.mxu0 %v18
    %70 = vmatprep.subr.mxu0 0.0
    %71 = vmatpush1.msra.mxu0 %v17
    %72 = vmatprep.subr.mxu0 0.0
    %73 = vmatpush1.msra.mxu0 %v16
    %74 = vmatprep.subr.mxu0 0.0
    %75 = vmatpush1.msra.mxu0 %v15
    %76 = vmatprep.subr.mxu0 0.0
    %77 = vmatpush1.msra.mxu0 %v14
    %78 = vmatprep.subr.mxu0 0.0
    %79 = vmatpush2.msra.mxu0 %v45
    %80 = vmatprep.subr.mxu0 0.0
    %81 = vmatpush2.msra.mxu0 %v44
    %82 = vmatprep.subr.mxu0 0.0
    %83 = vmatpush2.msra.mxu0 %v43
    %84 = vmatprep.subr.mxu0 0.0
    %85 = vmatpush2.msra.mxu0 %v42
    %86 = vmatprep.subr.mxu0 0.0
    %87 = vmatpush2.msra.mxu0 %v41
    %88 = vmatprep.subr.mxu0 0.0
    %89 = vmatpush2.msra.mxu0 %v40
    %90 = vmatprep.subr.mxu0 0.0
    %91 = vmatpush2.msra.mxu0 %v39
    %92 = vmatprep.subr.mxu0 0.0
    %93 = vmatpush2.msra.mxu0 %v38
    %94 = vmatprep.subr.mxu0 0.0
    %95 = vmatpush2.msra.mxu0 %v37
    %96 = vmatprep.subr.mxu0 0.0
    %97 = vmatpush2.msra.mxu0 %v36
    %98 = vmatprep.subr.mxu0 0.0
    %99 = vmatpush2.msra.mxu0 %v35
    %100 = vmatprep.subr.mxu0 0.0
    %101 = vmatpush2.msra.mxu0 %v34
    %102 = vmatprep.subr.mxu0 0.0
    %103 = vmatpush2.msra.mxu0 %v33
    %104 = vmatprep.subr.mxu0 0.0
    %105 = vmatpush2.msra.mxu0 %v32
    %106 = vmatprep.subr.mxu0 0.0
    %107 = vmatpush2.msra.mxu0 %v31
    %108 = vmatprep.subr.mxu0 0.0
    %109 = vmatpush2.msra.mxu0 %v30
    %110 = vmatprep.mubr.f32.mxu0 %v13
    %111 = vmatmul.mubr.f32.gmra.mxu0 %v12
    %v112 = vpop.f32.mrf.mxu0
    %v113 = vadd.f32 0.0, %v112
    %v114 = vpop.f32.mrf.mxu0
    %115 = vdwg.mxu0
    %vm116 = vcmask 261120
    %117 = vst.msk [vmem:[#allocation2] sm:$0xff] %vm116, %v113
    // Predicated region
    $region10: #{tpu_custom_call.1} parent=1 // pred_check
      _
    $region11: #{tpu_custom_call.1} parent=1 // pred_check_branch
      %119 = sbr.rel (0) target = $region13
    $region12: #{tpu_custom_call.1} parent=1 // pred_region
      %s121 = ssub.s32 128, 128
      %122 = vsyncadd [#allocation3], %s121
      %s124 = sshll.u32 [#allocation2], 4
      %s125 = int_to_ptr.vmem [resolvable:$true] %s124
      %127 = dma.vmem_to_hbm [thread:$0]  %s125, 128, %s2, [#allocation3]
    $region13: #{tpu_custom_call.1} parent=1 // pred_fallthru
      _
    // Predicated region
    $region14: #{tpu_custom_call.1} parent=1 // pred_check
      _
    $region15: #{tpu_custom_call.1} parent=1 // pred_check_branch
      %129 = sbr.rel (0) target = $region17
    $region16: #{tpu_custom_call.1} parent=1 // pred_region
      %130 = dma.done [#allocation3], 128
    $region17: #{tpu_custom_call.1} parent=1 // pred_fallthru
      _
    %131 = vsyncpa [#allocation3], 1

</llo_original>
